<compile_context>
chip_gen: v7x
topology: tpu7x:2x2x1
jax: 0.10.0
libtpu: 0.0.40
codegen_flags: <defaults>
</compile_context>

<pallas_src>
import jax
import jax.numpy as jnp
from jax.experimental import pallas as pl
from jax.experimental.pallas import tpu as pltpu


# ----------------------------------------------------------------------------
# Tunables / platform constants
# ----------------------------------------------------------------------------
_DEFAULT_VMEM_BUDGET = 24 << 20   # double-buffered in+out blocks (v7x-safe)
_VMEM_LIMIT_BYTES = 32 << 20      # scoped VMEM: raises v5e's 16 MiB default,
                                  # equals the v6e/v7x default scope
_CORE_PARALLEL_SEM = getattr(pltpu, "CORE_PARALLEL", None)
_PARALLEL_SEM = getattr(pltpu, "PARALLEL", "parallel")
_CORE_PARALLEL_OK = None          # lazily probed + cached


# ----------------------------------------------------------------------------
# Kernels
# ----------------------------------------------------------------------------
def _conv1x1_kernel(x_ref, w_ref, b_ref, o_ref):
    # x_ref: (n_tile, c_in, tile_s)   w_ref: (c_out, c_in)   b_ref: (c_out, 1)
    # o_ref: (n_tile, c_out, tile_s)
    w = w_ref[...]
    bias = b_ref[...].astype(jnp.float32)          # (c_out, 1), hoisted
    for b in range(x_ref.shape[0]):                # static unroll over folded N
        acc = jnp.dot(w, x_ref[b], preferred_element_type=jnp.float32)
        o_ref[b] = (acc + bias).astype(o_ref.dtype)


def _channel_pad_kernel(x_ref, o_ref):
    # x_ref: (n_tile, c_in, tile_s)   o_ref: (n_tile, c_out, tile_s), c_out > c_in
    # Two direct stores (no concatenate temporary): pure streaming copy + zero.
    n_tile, c_in, tile_s = x_ref.shape
    c_out = o_ref.shape[1]
    o_ref[:, :c_in, :] = x_ref[...]
    o_ref[:, c_in:, :] = jnp.zeros((n_tile, c_out - c_in, tile_s), o_ref.dtype)


# ----------------------------------------------------------------------------
# Tiling helper
# ----------------------------------------------------------------------------
def _pick_tiles(N, S, per_col_bytes, resident_bytes=0,
                vmem_budget=_DEFAULT_VMEM_BUDGET, tile_s=None, n_tile=None):
    """Pick (n_tile, tile_s).

    Constraint: 2 * n_tile * tile_s * per_col_bytes (+ resident) <= vmem_budget
    (double-buffered in+out blocks).  tile_s is either the whole spatial
    extent or a multiple of 128 (preferring one that divides S so every store
    is a full-width vst).  n_tile is a divisor of N (no ragged batch blocks).
    """
    budget = max(256 * 1024, vmem_budget - 2 * resident_bytes)
    max_cols = max(128, budget // (2 * per_col_bytes))

    if tile_s is None:
        if S <= max_cols:
            tile_s = S                      # single lane-dense block == full S
        else:
            cap = max(128, (max_cols // 128) * 128)
            tile_s = cap
            t = cap                         # prefer a divisor of S (no ragged tail)
            while t >= max(128, cap // 2):
                if S % t == 0:
                    tile_s = t
                    break
                t -= 128

    if n_tile is None:
        max_n = max(1, max_cols // max(tile_s, 1))
        n_tile = 1
        for d in range(min(N, max_n), 1, -1):
            if N % d == 0:                  # divisor of N -> no ragged batch block
                n_tile = d
                break

    return n_tile, tile_s


# ----------------------------------------------------------------------------
# pallas_call builders
# ----------------------------------------------------------------------------
def _conv1x1_call(x3, w, b2, *, n_tile, tile_s, batch_sem):
    N, c_in, S = x3.shape
    c_out = w.shape[0]
    grid = (pl.cdiv(N, n_tile), pl.cdiv(S, tile_s))

    cost = pl.CostEstimate(
        flops=2 * N * S * c_in * c_out,
        transcendentals=0,
        bytes_accessed=(N * c_in * S + N * c_out * S) * x3.dtype.itemsize
                       + c_out * c_in * w.dtype.itemsize
                       + c_out * b2.dtype.itemsize,
    )

    return pl.pallas_call(
        _conv1x1_kernel,
        out_shape=jax.ShapeDtypeStruct((N, c_out, S), x3.dtype),
        grid_spec=pltpu.PrefetchScalarGridSpec(
            num_scalar_prefetch=0,
            grid=grid,
            in_specs=[
                # Channel-major block, spatial (lane-dense) last.
                pl.BlockSpec((n_tile, c_in, tile_s), lambda n, s: (n, 0, s)),
                # Weight/bias: full-array resident blocks (constant index_map).
                pl.BlockSpec((c_out, c_in), lambda n, s: (0, 0)),
                pl.BlockSpec((c_out, 1), lambda n, s: (0, 0)),
            ],
            out_specs=pl.BlockSpec((n_tile, c_out, tile_s),
                                   lambda n, s: (n, 0, s)),
        ),
        compiler_params=pltpu.CompilerParams(
            dimension_semantics=(batch_sem, _PARALLEL_SEM),
            vmem_limit_bytes=_VMEM_LIMIT_BYTES),
        cost_estimate=cost,
    )(x3, w, b2)


def _channel_pad_call(x3, c_out, *, n_tile, tile_s, batch_sem):
    N, c_in, S = x3.shape
    grid = (pl.cdiv(N, n_tile), pl.cdiv(S, tile_s))
    return pl.pallas_call(
        _channel_pad_kernel,
        out_shape=jax.ShapeDtypeStruct((N, c_out, S), x3.dtype),
        grid_spec=pltpu.PrefetchScalarGridSpec(
            num_scalar_prefetch=0,
            grid=grid,
            in_specs=[pl.BlockSpec((n_tile, c_in, tile_s),
                                   lambda n, s: (n, 0, s))],
            out_specs=pl.BlockSpec((n_tile, c_out, tile_s),
                                   lambda n, s: (n, 0, s)),
        ),
        compiler_params=pltpu.CompilerParams(
            dimension_semantics=(batch_sem, _PARALLEL_SEM),
            vmem_limit_bytes=_VMEM_LIMIT_BYTES),
    )(x3)


# ----------------------------------------------------------------------------
# CORE_PARALLEL (dual-TC on v7x) with safe fallback
# ----------------------------------------------------------------------------
def _core_parallel_supported():
    """Probe once whether CORE_PARALLEL grid semantics compile AND produce
    correct results on this JAX/chip combo; cache the answer."""
    global _CORE_PARALLEL_OK
    if _CORE_PARALLEL_OK is not None:
        return _CORE_PARALLEL_OK
    if _CORE_PARALLEL_SEM is None:
        _CORE_PARALLEL_OK = False
        return False
    try:
        x = (jnp.arange(2 * 8 * 256, dtype=jnp.float32) % 7.0).reshape(2, 8, 256)
        w = ((jnp.arange(64, dtype=jnp.float32) % 5.0) * 0.25).reshape(8, 8)
        b = jnp.linspace(-1.0, 1.0, 8, dtype=jnp.float32).reshape(8, 1)
        y = _conv1x1_call(x, w, b, n_tile=1, tile_s=128,
                          batch_sem=_CORE_PARALLEL_SEM)
        ref = jnp.einsum("oc,ncs->nos", w, x) + b[None]
        _CORE_PARALLEL_OK = bool(jnp.allclose(y, ref, atol=1e-4, rtol=1e-4))
    except Exception:
        _CORE_PARALLEL_OK = False
    return _CORE_PARALLEL_OK


def _run_batched(builder, args, *, n_tile, tile_s):
    """Run `builder`, preferring CORE_PARALLEL on the batch-block grid axis
    (shards across v7x's 2 TensorCores); fall back to plain parallel."""
    global _CORE_PARALLEL_OK
    if _core_parallel_supported():
        try:
            return builder(*args, n_tile=n_tile, tile_s=tile_s,
                           batch_sem=_CORE_PARALLEL_SEM)
        except Exception:
            _CORE_PARALLEL_OK = False        # demote for subsequent calls
    return builder(*args, n_tile=n_tile, tile_s=tile_s,
                   batch_sem=_PARALLEL_SEM)


# ----------------------------------------------------------------------------
# Public wrappers
# ----------------------------------------------------------------------------
def conv1x1_nchw_pallas(x3, w, b2, *, tile_s=None, n_tile=None,
                        vmem_budget=_DEFAULT_VMEM_BUDGET):
    """x3: (N, c_in, S), w: (c_out, c_in), b2: (c_out, 1) -> (N, c_out, S)."""
    N, c_in, S = x3.shape
    c_out = w.shape[0]
    resident = c_out * c_in * w.dtype.itemsize + c_out * b2.dtype.itemsize
    n_tile, tile_s = _pick_tiles(N, S, (c_in + c_out) * x3.dtype.itemsize,
                                 resident, vmem_budget,
                                 tile_s=tile_s, n_tile=n_tile)
    return _run_batched(_conv1x1_call, (x3, w, b2),
                        n_tile=n_tile, tile_s=tile_s)


def channel_pad_pallas(x3, c_out, *, tile_s=None, n_tile=None,
                       vmem_budget=_DEFAULT_VMEM_BUDGET):
    """Zero-pad channels: (N, c_in, S) -> (N, c_out, S), c_out > c_in."""
    N, c_in, S = x3.shape
    n_tile, tile_s = _pick_tiles(N, S, (c_in + c_out) * x3.dtype.itemsize,
                                 0, vmem_budget,
                                 tile_s=tile_s, n_tile=n_tile)
    return _run_batched(_channel_pad_call, (x3, c_out),
                        n_tile=n_tile, tile_s=tile_s)


# ----------------------------------------------------------------------------
# Module
# ----------------------------------------------------------------------------
class AlignPallas:
    """JAX/Pallas port of the PyTorch `align` module (NCHW in/out)."""

    def __init__(self, c_in, c_out, key):
        self.c_in = c_in
        self.c_out = c_out
        if c_in > c_out:
            kw, kb = jax.random.split(key)
            # nn.Conv2d(c_in, c_out, 1) weight (c_out,c_in,1,1) -> (c_out,c_in)
            bound = 1.0 / (c_in ** 0.5)
            self.w = jax.random.uniform(kw, (c_out, c_in), jnp.float32,
                                        -bound, bound)
            self.b = jax.random.uniform(kb, (c_out,), jnp.float32,
                                        -bound, bound)
            self.b2 = self.b.reshape(c_out, 1)           # precomputed once
            self._w_by_dtype = {self.w.dtype: self.w}    # per-dtype cast cache
        else:
            self.w = None
            self.b = None
            self.b2 = None
            self._w_by_dtype = {}

    def _weight_for(self, dtype):
        dt = jnp.dtype(dtype)
        if dt not in self._w_by_dtype:                    # cast once, reuse
            self._w_by_dtype[dt] = self.w.astype(dt)
        return self._w_by_dtype[dt]

    def __call__(self, x):
        # x: (N, C_in, H, W) -- NCHW, as in PyTorch.
        N, C, H, W = x.shape
        assert C == self.c_in
        if self.c_in > self.c_out:
            x3 = x.reshape(N, C, H * W)                   # contiguous reshape
            y3 = conv1x1_nchw_pallas(x3, self._weight_for(x.dtype), self.b2)
            return y3.reshape(N, self.c_out, H, W)
        if self.c_in < self.c_out:
            x3 = x.reshape(N, C, H * W)
            y3 = channel_pad_pallas(x3, self.c_out)
            return y3.reshape(N, self.c_out, H, W)
        return x                                          # identity branch


# ----------------------------------------------------------------------------
# Self-test
# ----------------------------------------------------------------------------
if __name__ == "__main__":
    key = jax.random.PRNGKey(0)
    k_x, k_p = jax.random.split(key)

    N, C_IN, C_OUT, H, W = 2, 8, 4, 16, 16
    x = jax.random.normal(k_x, (N, C_IN, H, W), jnp.float32)

    # --- conv branch (c_in > c_out): Pallas 1x1 conv in NCHW ---
    mod = AlignPallas(C_IN, C_OUT, k_p)
    y = jax.block_until_ready(mod(x))
    assert y.shape == (N, C_OUT, H, W)
    y_ref = jnp.einsum("nchw,oc->nohw", x, mod.w) + mod.b[None, :, None, None]
    assert jnp.allclose(y, y_ref, atol=1e-5), "conv1x1 mismatch vs reference"

    # --- ragged spatial extent (S=300, forced 128-wide tile, batch folding) ---
    x3 = jax.random.normal(k_x, (2, C_IN, 300), jnp.float32)
    y3 = jax.block_until_ready(
        conv1x1_nchw_pallas(x3, mod.w, mod.b2, tile_s=128))
    y3_ref = jnp.einsum("ncs,oc->nos", x3, mod.w) + mod.b2[None]
    assert jnp.allclose(y3, y3_ref, atol=1e-5), "ragged-tail mismatch"

    # --- multiple batch blocks (exercises batch-axis grid / core-parallel) ---
    x3b = jax.random.normal(k_x, (4, C_IN, 256), jnp.float32)
    y3b = jax.block_until_ready(
        conv1x1_nchw_pallas(x3b, mod.w, mod.b2, tile_s=128, n_tile=1))
    y3b_ref = jnp.einsum("ncs,oc->nos", x3b, mod.w) + mod.b2[None]
    assert jnp.allclose(y3b, y3b_ref, atol=1e-5), "multi-batch-block mismatch"

    # --- bf16 path (halves HBM traffic; f32 MXU accumulate, cached cast) ---
    y_bf16 = jax.block_until_ready(mod(x.astype(jnp.bfloat16)))
    assert jnp.allclose(y_bf16.astype(jnp.float32), y_ref,
                        atol=0.1, rtol=0.05), "bf16 path mismatch"

    # --- zero-pad branch (c_in < c_out): two-store streaming pad kernel ---
    mod_pad = AlignPallas(C_OUT, C_IN, k_p)
    x_small = jax.random.normal(k_x, (N, C_OUT, H, W), jnp.float32)
    y_pad = jax.block_until_ready(mod_pad(x_small))
    y_pad_ref = jnp.pad(x_small, ((0, 0), (0, C_IN - C_OUT), (0, 0), (0, 0)))
    assert y_pad.shape == (N, C_IN, H, W)
    assert jnp.array_equal(y_pad, y_pad_ref), "channel-pad mismatch"

    # --- identity branch ---
    mod_id = AlignPallas(C_IN, C_IN, k_p)
    y_id = jax.block_until_ready(mod_id(x))
    assert y_id.shape == x.shape

    print("KERNEL_OK")
</pallas_src>

<mosaic_0001>
module attributes {stable_mosaic.version = 11 : i64} {
  func.func @_conv1x1_kernel(%arg0: i32, %arg1: i32, %arg2: memref<1x8x128xf32, #tpu.memory_space<vmem>>, %arg3: memref<8x8xf32, #tpu.memory_space<vmem>>, %arg4: memref<8x1xf32, #tpu.memory_space<vmem>>, %arg5: memref<1x8x128xf32, #tpu.memory_space<vmem>>) attributes {dimension_semantics = [#tpu.dimension_semantics<core_parallel>, #tpu.dimension_semantics<parallel>], iteration_bounds = array<i64: 2, 2>, scalar_prefetch = 0 : i64, scratch_operands = 0 : i64, tpu.core_type = #tpu.core_type<tc>, window_params = [{transform_indices = @transform_0, window_bounds = array<i64: 1, 8, 128>}, {pipeline_mode = #tpu.pipeline_mode<synchronous>, transform_indices = @transform_1, window_bounds = array<i64: 8, 8>}, {pipeline_mode = #tpu.pipeline_mode<synchronous>, transform_indices = @transform_2, window_bounds = array<i64: 8, 1>}, {transform_indices = @transform_3, window_bounds = array<i64: 1, 8, 128>}]} {
    %c0 = arith.constant 0 : index
    %c0_0 = arith.constant 0 : index
    %0 = vector.load %arg3[%c0, %c0_0] : memref<8x8xf32, #tpu.memory_space<vmem>>, vector<8x8xf32>
    %c0_1 = arith.constant 0 : index
    %c0_2 = arith.constant 0 : index
    %1 = vector.load %arg4[%c0_1, %c0_2] : memref<8x1xf32, #tpu.memory_space<vmem>>, vector<8x1xf32>
    %c0_3 = arith.constant 0 : index
    %c0_4 = arith.constant 0 : index
    %c0_5 = arith.constant 0 : index
    %2 = vector.load %arg2[%c0_3, %c0_4, %c0_5] : memref<1x8x128xf32, #tpu.memory_space<vmem>>, vector<1x8x128xf32>
    %3 = vector.shape_cast %2 : vector<1x8x128xf32> to vector<8x128xf32>
    %cst = arith.constant dense<0.000000e+00> : vector<8x128xf32>
    %4 = tpu.matmul %0, %3, %cst {dimension_numbers = #tpu.dot_dimension_numbers<[1], [0], [0], [1], [0, 0, 1, 1], [], []>} : vector<8x8xf32>, vector<8x128xf32>, vector<8x128xf32> -> vector<8x128xf32>
    %5 = vector.broadcast %1 : vector<8x1xf32> to vector<8x128xf32>
    %6 = arith.addf %4, %5 : vector<8x128xf32>
    %c0_6 = arith.constant 0 : index
    %c0_7 = arith.constant 0 : index
    %c0_8 = arith.constant 0 : index
    %7 = vector.load %arg5[%c0_6, %c0_7, %c0_8] : memref<1x8x128xf32, #tpu.memory_space<vmem>>, vector<1x8x128xf32>
    %8 = vector.shape_cast %7 : vector<1x8x128xf32> to vector<8x128xf32>
    %9 = vector.shape_cast %6 : vector<8x128xf32> to vector<1x8x128xf32>
    tpu.vector_store %arg5[%c0_6, %c0_7, %c0_8], %9 {strides = array<i32>} : memref<1x8x128xf32, #tpu.memory_space<vmem>>, vector<1x8x128xf32>,
    return
  }
  func.func @transform_0(%arg0: i32, %arg1: i32) -> (i32, i32, i32) {
    %c0_i32 = arith.constant 0 : i32
    %c0_i32_0 = arith.constant 0 : i32
    return %arg0, %c0_i32, %arg1 : i32, i32, i32
  }
  func.func @transform_1(%arg0: i32, %arg1: i32) -> (i32, i32) {
    %c0_i32 = arith.constant 0 : i32
    %c0_i32_0 = arith.constant 0 : i32
    %c0_i32_1 = arith.constant 0 : i32
    return %c0_i32, %c0_i32_0 : i32, i32
  }
  func.func @transform_2(%arg0: i32, %arg1: i32) -> (i32, i32) {
    %c0_i32 = arith.constant 0 : i32
    %c0_i32_0 = arith.constant 0 : i32
    %c0_i32_1 = arith.constant 0 : i32
    return %c0_i32, %c0_i32_0 : i32, i32
  }
  func.func @transform_3(%arg0: i32, %arg1: i32) -> (i32, i32, i32) {
    %c0_i32 = arith.constant 0 : i32
    %c0_i32_0 = arith.constant 0 : i32
    return %arg0, %c0_i32, %arg1 : i32, i32, i32
  }
}

module attributes {stable_mosaic.version = 11 : i64} {
  func.func @_conv1x1_kernel(%arg0: i32, %arg1: i32, %arg2: memref<2x8x256xf32, #tpu.memory_space<vmem>>, %arg3: memref<4x8xf32, #tpu.memory_space<vmem>>, %arg4: memref<4x1xf32, #tpu.memory_space<vmem>>, %arg5: memref<2x4x256xf32, #tpu.memory_space<vmem>>) attributes {dimension_semantics = [#tpu.dimension_semantics<parallel>, #tpu.dimension_semantics<parallel>], iteration_bounds = array<i64: 1, 1>, scalar_prefetch = 0 : i64, scratch_operands = 0 : i64, tpu.core_type = #tpu.core_type<tc>, window_params = [{transform_indices = @transform_0, window_bounds = array<i64: 2, 8, 256>}, {pipeline_mode = #tpu.pipeline_mode<synchronous>, transform_indices = @transform_1, window_bounds = array<i64: 4, 8>}, {pipeline_mode = #tpu.pipeline_mode<synchronous>, transform_indices = @transform_2, window_bounds = array<i64: 4, 1>}, {transform_indices = @transform_3, window_bounds = array<i64: 2, 4, 256>}]} {
    %c0 = arith.constant 0 : index
    %c0_0 = arith.constant 0 : index
    %0 = vector.load %arg3[%c0, %c0_0] : memref<4x8xf32, #tpu.memory_space<vmem>>, vector<4x8xf32>
    %c0_1 = arith.constant 0 : index
    %c0_2 = arith.constant 0 : index
    %1 = vector.load %arg4[%c0_1, %c0_2] : memref<4x1xf32, #tpu.memory_space<vmem>>, vector<4x1xf32>
    %c0_3 = arith.constant 0 : index
    %c0_4 = arith.constant 0 : index
    %c0_5 = arith.constant 0 : index
    %2 = vector.load %arg2[%c0_3, %c0_4, %c0_5] : memref<2x8x256xf32, #tpu.memory_space<vmem>>, vector<1x8x256xf32>
    %3 = vector.shape_cast %2 : vector<1x8x256xf32> to vector<8x256xf32>
    %cst = arith.constant dense<0.000000e+00> : vector<4x256xf32>
    %4 = tpu.matmul %0, %3, %cst {dimension_numbers = #tpu.dot_dimension_numbers<[1], [0], [0], [1], [0, 0, 1, 1], [], []>} : vector<4x8xf32>, vector<8x256xf32>, vector<4x256xf32> -> vector<4x256xf32>
    %5 = vector.broadcast %1 : vector<4x1xf32> to vector<4x256xf32>
    %6 = arith.addf %4, %5 : vector<4x256xf32>
    %c0_6 = arith.constant 0 : index
    %c0_7 = arith.constant 0 : index
    %c0_8 = arith.constant 0 : index
    %7 = vector.load %arg5[%c0_6, %c0_7, %c0_8] : memref<2x4x256xf32, #tpu.memory_space<vmem>>, vector<1x4x256xf32>
    %8 = vector.shape_cast %7 : vector<1x4x256xf32> to vector<4x256xf32>
    %9 = vector.shape_cast %6 : vector<4x256xf32> to vector<1x4x256xf32>
    tpu.vector_store %arg5[%c0_6, %c0_7, %c0_8], %9 {strides = array<i32>} : memref<2x4x256xf32, #tpu.memory_space<vmem>>, vector<1x4x256xf32>,
    %c1 = arith.constant 1 : index
    %c0_9 = arith.constant 0 : index
    %c0_10 = arith.constant 0 : index
    %10 = vector.load %arg2[%c1, %c0_9, %c0_10] : memref<2x8x256xf32, #tpu.memory_space<vmem>>, vector<1x8x256xf32>
    %11 = vector.shape_cast %10 : vector<1x8x256xf32> to vector<8x256xf32>
    %cst_11 = arith.constant dense<0.000000e+00> : vector<4x256xf32>
    %12 = tpu.matmul %0, %11, %cst_11 {dimension_numbers = #tpu.dot_dimension_numbers<[1], [0], [0], [1], [0, 0, 1, 1], [], []>} : vector<4x8xf32>, vector<8x256xf32>, vector<4x256xf32> -> vector<4x256xf32>
    %13 = vector.broadcast %1 : vector<4x1xf32> to vector<4x256xf32>
    %14 = arith.addf %12, %13 : vector<4x256xf32>
    %c1_12 = arith.constant 1 : index
    %c0_13 = arith.constant 0 : index
    %c0_14 = arith.constant 0 : index
    %15 = vector.load %arg5[%c1_12, %c0_13, %c0_14] : memref<2x4x256xf32, #tpu.memory_space<vmem>>, vector<1x4x256xf32>
    %16 = vector.shape_cast %15 : vector<1x4x256xf32> to vector<4x256xf32>
    %17 = vector.shape_cast %14 : vector<4x256xf32> to vector<1x4x256xf32>
    tpu.vector_store %arg5[%c1_12, %c0_13, %c0_14], %17 {strides = array<i32>} : memref<2x4x256xf32, #tpu.memory_space<vmem>>, vector<1x4x256xf32>,
    return
  }
  func.func @transform_0(%arg0: i32, %arg1: i32) -> (i32, i32, i32) {
    %c0_i32 = arith.constant 0 : i32
    %c0_i32_0 = arith.constant 0 : i32
    return %arg0, %c0_i32, %arg1 : i32, i32, i32
  }
  func.func @transform_1(%arg0: i32, %arg1: i32) -> (i32, i32) {
    %c0_i32 = arith.constant 0 : i32
    %c0_i32_0 = arith.constant 0 : i32
    %c0_i32_1 = arith.constant 0 : i32
    return %c0_i32, %c0_i32_0 : i32, i32
  }
  func.func @transform_2(%arg0: i32, %arg1: i32) -> (i32, i32) {
    %c0_i32 = arith.constant 0 : i32
    %c0_i32_0 = arith.constant 0 : i32
    %c0_i32_1 = arith.constant 0 : i32
    return %c0_i32, %c0_i32_0 : i32, i32
  }
  func.func @transform_3(%arg0: i32, %arg1: i32) -> (i32, i32, i32) {
    %c0_i32 = arith.constant 0 : i32
    %c0_i32_0 = arith.constant 0 : i32
    return %arg0, %c0_i32, %arg1 : i32, i32, i32
  }
}

</mosaic_0001>

<llo_original>
// kernel: tpu_custom_call.1
$region0: #{tpu_custom_call.1}
  #allocation0 [shape = 'u32[]', space=smem, size = 0x4, offset = 0x4, fixed_abs, tag = 'smem constant byte address 0x4 - core index']
  #allocation1 [shape = 'u32[144,128]{1,0:T(1,128)}', space=vmem, size = 0x12000, scoped, tag = 'internal scratch']
  %s0 = inlined_call_operand.hbm [shape: f32[2,8,256], index: 0, kind: input, shape index: {}]
  %s1 = inlined_call_operand.vmem [shape: f32[4,8], index: 1, kind: input, shape index: {}]
  %s2 = inlined_call_operand.vmem [shape: f32[4,1], index: 2, kind: input, shape index: {}]
  %s3 = inlined_call_operand.hbm [shape: f32[2,4,256], index: 3, kind: output, shape index: {}]
  %s4 = sld [smem:[#allocation0]]
  $region26: #{tpu_custom_call.1} parent=0
    _
  %s6 = ssub.s32 1, %s4
  %s7 = scalar_select 0, %s6, %s4
  $region1: #{tpu_custom_call.1} parent=0
    #allocation2 [shape = 'u8[16384]{0}', space=vmem, size = 0x4000, scoped, tag = 'input window, operand 0, single buffered']
    #allocation3 [shape = 's32[1]{0}', space=sflag, size = 0x4, scoped, tag = 'scoped memory for tpu_custom_call.1']
    #allocation4 [shape = 's32[1]{0}', space=sflag, size = 0x4, scoped, tag = 'scoped memory for tpu_custom_call.1']
    #allocation5 [shape = 'u8[8192]{0}', space=vmem, size = 0x2000, scoped, tag = 'output window, operand 0, single buffered']
    %8 = vsyncpa [#allocation3], 0
    %9 = vsyncpa [#allocation4], 0
    // Predicated region
    $region2: #{tpu_custom_call.1} parent=1 // pred_check
      _
    $region3: #{tpu_custom_call.1} parent=1 // pred_check_branch
      %11 = sbr.rel (0) target = $region5
    $region4: #{tpu_custom_call.1} parent=1 // pred_region
      %s13 = ssub.s32 512, 512
      %14 = vsyncadd [#allocation3], %s13
      %s15 = sshll.u32 [#allocation2], 4
      %s16 = int_to_ptr.vmem [resolvable:$true] %s15
      %21 = dma.hbm_to_vmem [thread:$0]  %s0, 512, %s16, [#allocation3], 256, 256, 16
    $region5: #{tpu_custom_call.1} parent=1 // pred_fallthru
      _
    // Predicated region
    $region6: #{tpu_custom_call.1} parent=1 // pred_check
      _
    $region7: #{tpu_custom_call.1} parent=1 // pred_check_branch
      %23 = sbr.rel (0) target = $region9
    $region8: #{tpu_custom_call.1} parent=1 // pred_region
      _
    $region9: #{tpu_custom_call.1} parent=1 // pred_fallthru
      _
    // Predicated region
    $region10: #{tpu_custom_call.1} parent=1 // pred_check
      _
    $region11: #{tpu_custom_call.1} parent=1 // pred_check_branch
      %25 = sbr.rel (0) target = $region13
    $region12: #{tpu_custom_call.1} parent=1 // pred_region
      _
    $region13: #{tpu_custom_call.1} parent=1 // pred_fallthru
      _
    // Predicated region
    $region14: #{tpu_custom_call.1} parent=1 // pred_check
      _
    $region15: #{tpu_custom_call.1} parent=1 // pred_check_branch
      %27 = sbr.rel (0) target = $region17
    $region16: #{tpu_custom_call.1} parent=1 // pred_region
      %28 = dma.done [#allocation3], 512
    $region17: #{tpu_custom_call.1} parent=1 // pred_fallthru
      _
    %v29 = vld [vmem:[%s1] sm:$0xf]
    %v30 = vld [vmem:[%s2] sm:$0xf]
    %v31 = vld [vmem:[#allocation2] sm:$0xff]
    %v32 = vld [vmem:[#allocation2 + $0x8] sm:$0xff]
    %34 = vset.pattern.permute.xlu0 0
    %35 = vperm.xlu0 %34, %v30
    %v36 = vpop.permute.xlu0 %35
    %vm38 = vcmask 64512
    %v40 = vsel %vm38, %v29, 0
    %42 = vmatprep.subr.mxu0 %v32
    %43 = vmatpush1.msra.mxu0 %v31
    %44 = vmatprep.subr.mxu0 0.0
    %45 = vmatpush1.msra.mxu0 0.0
    %46 = vmatprep.subr.mxu0 0.0
    %47 = vmatpush1.msra.mxu0 0.0
    %48 = vmatprep.subr.mxu0 0.0
    %49 = vmatpush1.msra.mxu0 0.0
    %50 = vmatprep.subr.mxu0 0.0
    %51 = vmatpush1.msra.mxu0 0.0
    %52 = vmatprep.subr.mxu0 0.0
    %53 = vmatpush1.msra.mxu0 0.0
    %54 = vmatprep.subr.mxu0 0.0
    %55 = vmatpush1.msra.mxu0 0.0
    %56 = vmatprep.subr.mxu0 0.0
    %57 = vmatpush1.msra.mxu0 0.0
    %58 = vmatprep.subr.mxu0 0.0
    %59 = vmatpush1.msra.mxu0 0.0
    %60 = vmatprep.subr.mxu0 0.0
    %61 = vmatpush1.msra.mxu0 0.0
    %62 = vmatprep.subr.mxu0 0.0
    %63 = vmatpush1.msra.mxu0 0.0
    %64 = vmatprep.subr.mxu0 0.0
    %65 = vmatpush1.msra.mxu0 0.0
    %66 = vmatprep.subr.mxu0 0.0
    %67 = vmatpush1.msra.mxu0 0.0
    %68 = vmatprep.subr.mxu0 0.0
    %69 = vmatpush1.msra.mxu0 0.0
    %70 = vmatprep.subr.mxu0 0.0
    %71 = vmatpush1.msra.mxu0 0.0
    %72 = vmatprep.subr.mxu0 0.0
    %73 = vmatpush1.msra.mxu0 0.0
    %74 = vmatprep.subr.mxu0 0.0
    %75 = vmatpush1.msra.mxu0 0.0
    %76 = vmatprep.subr.mxu0 0.0
    %77 = vmatpush1.msra.mxu0 0.0
    %78 = vmatprep.subr.mxu0 0.0
    %79 = vmatpush1.msra.mxu0 0.0
    %80 = vmatprep.subr.mxu0 0.0
    %81 = vmatpush1.msra.mxu0 0.0
    %82 = vmatprep.subr.mxu0 0.0
    %83 = vmatpush1.msra.mxu0 0.0
    %84 = vmatprep.subr.mxu0 0.0
    %85 = vmatpush1.msra.mxu0 0.0
    %86 = vmatprep.subr.mxu0 0.0
    %87 = vmatpush1.msra.mxu0 0.0
    %88 = vmatprep.subr.mxu0 0.0
    %89 = vmatpush1.msra.mxu0 0.0
    %90 = vmatprep.subr.mxu0 0.0
    %91 = vmatpush1.msra.mxu0 0.0
    %92 = vmatprep.subr.mxu0 0.0
    %93 = vmatpush1.msra.mxu0 0.0
    %94 = vmatprep.subr.mxu0 0.0
    %95 = vmatpush1.msra.mxu0 0.0
    %96 = vmatprep.subr.mxu0 0.0
    %97 = vmatpush1.msra.mxu0 0.0
    %98 = vmatprep.subr.mxu0 0.0
    %99 = vmatpush1.msra.mxu0 0.0
    %100 = vmatprep.subr.mxu0 0.0
    %101 = vmatpush1.msra.mxu0 0.0
    %102 = vmatprep.subr.mxu0 0.0
    %103 = vmatpush1.msra.mxu0 0.0
    %104 = vmatprep.subr.mxu0 0.0
    %105 = vmatpush1.msra.mxu0 0.0
    %106 = vmatprep.mubr.f32.mxu0 0.0
    %107 = vmatmul.mubr.f32.gmra.mrb[0].mxu0 %v40
    %v108 = vpop.f32.mrb[0].mxu0
    %v109 = vadd.f32 %v36, %v108
    %v110 = vpop.f32.mrb[0].mxu0
    %v111 = vadd.f32 %v36, %v110
    %112 = vdwg.mxu0
    %v115 = vcombine.low %v109, %v111
    %117 = vst [vmem:[#allocation5] sm:$0xff] %v115
    %s118 = scalar_lea.vmem [#allocation2], 16
    %v119 = vld [vmem:[%s118] sm:$0xff]
    %v120 = vld [vmem:[%s118 + $0x8] sm:$0xff]
    %121 = vmatprep.subr.mxu0 %v120
    %122 = vmatpush1.msra.mxu0 %v119
    %123 = vmatprep.subr.mxu0 0.0
    %124 = vmatpush1.msra.mxu0 0.0
    %125 = vmatprep.subr.mxu0 0.0
    %126 = vmatpush1.msra.mxu0 0.0
    %127 = vmatprep.subr.mxu0 0.0
    %128 = vmatpush1.msra.mxu0 0.0
    %129 = vmatprep.subr.mxu0 0.0
    %130 = vmatpush1.msra.mxu0 0.0
    %131 = vmatprep.subr.mxu0 0.0
    %132 = vmatpush1.msra.mxu0 0.0
    %133 = vmatprep.subr.mxu0 0.0
    %134 = vmatpush1.msra.mxu0 0.0
    %135 = vmatprep.subr.mxu0 0.0
    %136 = vmatpush1.msra.mxu0 0.0
    %137 = vmatprep.subr.mxu0 0.0
    %138 = vmatpush1.msra.mxu0 0.0
    %139 = vmatprep.subr.mxu0 0.0
    %140 = vmatpush1.msra.mxu0 0.0
    %141 = vmatprep.subr.mxu0 0.0
    %142 = vmatpush1.msra.mxu0 0.0
    %143 = vmatprep.subr.mxu0 0.0
    %144 = vmatpush1.msra.mxu0 0.0
    %145 = vmatprep.subr.mxu0 0.0
    %146 = vmatpush1.msra.mxu0 0.0
    %147 = vmatprep.subr.mxu0 0.0
    %148 = vmatpush1.msra.mxu0 0.0
    %149 = vmatprep.subr.mxu0 0.0
    %150 = vmatpush1.msra.mxu0 0.0
    %151 = vmatprep.subr.mxu0 0.0
    %152 = vmatpush1.msra.mxu0 0.0
    %153 = vmatprep.subr.mxu0 0.0
    %154 = vmatpush1.msra.mxu0 0.0
    %155 = vmatprep.subr.mxu0 0.0
    %156 = vmatpush1.msra.mxu0 0.0
    %157 = vmatprep.subr.mxu0 0.0
    %158 = vmatpush1.msra.mxu0 0.0
    %159 = vmatprep.subr.mxu0 0.0
    %160 = vmatpush1.msra.mxu0 0.0
    %161 = vmatprep.subr.mxu0 0.0
    %162 = vmatpush1.msra.mxu0 0.0
    %163 = vmatprep.subr.mxu0 0.0
    %164 = vmatpush1.msra.mxu0 0.0
    %165 = vmatprep.subr.mxu0 0.0
    %166 = vmatpush1.msra.mxu0 0.0
    %167 = vmatprep.subr.mxu0 0.0
    %168 = vmatpush1.msra.mxu0 0.0
    %169 = vmatprep.subr.mxu0 0.0
    %170 = vmatpush1.msra.mxu0 0.0
    %171 = vmatprep.subr.mxu0 0.0
    %172 = vmatpush1.msra.mxu0 0.0
    %173 = vmatprep.subr.mxu0 0.0
    %174 = vmatpush1.msra.mxu0 0.0
    %175 = vmatprep.subr.mxu0 0.0
    %176 = vmatpush1.msra.mxu0 0.0
    %177 = vmatprep.subr.mxu0 0.0
    %178 = vmatpush1.msra.mxu0 0.0
    %179 = vmatprep.subr.mxu0 0.0
    %180 = vmatpush1.msra.mxu0 0.0
    %181 = vmatprep.subr.mxu0 0.0
    %182 = vmatpush1.msra.mxu0 0.0
    %183 = vmatprep.subr.mxu0 0.0
    %184 = vmatpush1.msra.mxu0 0.0
    %185 = vmatprep.mubr.f32.mxu0 0.0
    %186 = vmatmul.mubr.f32.gmra.mrb[0].mxu0 %v40
    %v187 = vpop.f32.mrb[0].mxu0
    %v188 = vadd.f32 %v36, %v187
    %v189 = vpop.f32.mrb[0].mxu0
    %v190 = vadd.f32 %v36, %v189
    %191 = vdwg.mxu0
    %v194 = vcombine.low %v188, %v190
    %s196 = scalar_lea.vmem [#allocation5], 8
    %197 = vst [vmem:[%s196] sm:$0xff] %v194
    // Predicated region
    $region18: #{tpu_custom_call.1} parent=1 // pred_check
      _
    $region19: #{tpu_custom_call.1} parent=1 // pred_check_branch
      %199 = sbr.rel (0) target = $region21
    $region20: #{tpu_custom_call.1} parent=1 // pred_region
      %s201 = ssub.s32 256, 256
      %202 = vsyncadd [#allocation4], %s201
      %s203 = sshll.u32 [#allocation5], 4
      %s204 = int_to_ptr.vmem [resolvable:$true] %s203
      %209 = dma.vmem_to_hbm [thread:$0]  %s204, 256, %s3, [#allocation4], 128, 128, 8
    $region21: #{tpu_custom_call.1} parent=1 // pred_fallthru
      _
    // Predicated region
    $region22: #{tpu_custom_call.1} parent=1 // pred_check
      _
    $region23: #{tpu_custom_call.1} parent=1 // pred_check_branch
      %211 = sbr.rel (0) target = $region25
    $region24: #{tpu_custom_call.1} parent=1 // pred_region
      %212 = dma.done [#allocation4], 256
    $region25: #{tpu_custom_call.1} parent=1 // pred_fallthru
      _
    %213 = vsyncpa [#allocation3], 1
    %214 = vsyncpa [#allocation4], 1

</llo_original>
